<compile_context>
chip_gen: v7x
topology: tpu7x:2x2x1
jax: 0.10.0
libtpu: 0.0.40
codegen_flags: <defaults>
</compile_context>

<pallas_src>
import functools
import math

import jax
import jax.numpy as jnp
from jax.experimental import pallas as pl
from jax.experimental.pallas import tpu as pltpu

_LANE = 128
_SUBLANE = 8


def _round_up(n, m):
    return ((n + m - 1) // m) * m


def _make_qnet_kernel(vpu_fc1: bool):
    def qnet_kernel(x_ref, w1_ref, b1_ref, w2_ref, b2_ref, w3_ref, b3_ref, o_ref):
        x = x_ref[...]                       # f32 [tb, in_size]
        compute_dtype = w2_ref.dtype         # f32 or bf16 weights

        if vpu_fc1:
            # input_size is tiny (2 for MountainCar): K broadcast multiply-adds
            # on the VPU beat an MXU round trip at <2% utilization.
            w1 = w1_ref[...].astype(jnp.float32)
            h1 = jnp.broadcast_to(b1_ref[...], (x.shape[0], w1.shape[1]))
            for k in range(x.shape[1]):      # static unroll, K is small
                h1 = h1 + x[:, k:k + 1] * w1[k:k + 1, :]
        else:
            h1 = jnp.dot(x.astype(compute_dtype), w1_ref[...],
                         preferred_element_type=jnp.float32) + b1_ref[...]
        h1 = jnp.maximum(h1, 0.0)

        # fc2 + relu (MXU, lane-dense 128-wide, f32 accumulation)
        h2 = jnp.dot(h1.astype(compute_dtype), w2_ref[...],
                     preferred_element_type=jnp.float32)
        h2 = jnp.maximum(h2 + b2_ref[...], 0.0)

        # fc3 (no activation)
        out = jnp.dot(h2.astype(compute_dtype), w3_ref[...],
                      preferred_element_type=jnp.float32)
        o_ref[...] = (out + b3_ref[...]).astype(o_ref.dtype)

    return qnet_kernel


def prepare_qnetwork_params(params, weights_dtype=jnp.float32):
    """One-time prep: lane-dense zero-pad feature dims to 128 and (optionally)
    cast weights to bf16.  Biases stay f32 (tiny, used in the f32 epilogue).
    Zero padding is exact through relu and the downstream matmuls."""
    w1, b1 = params["w1"], params["b1"]
    w2, b2 = params["w2"], params["b2"]
    w3, b3 = params["w3"], params["b3"]

    hidden = w1.shape[1]
    out_size = w3.shape[1]
    hp = _round_up(hidden, _LANE)
    op = _round_up(out_size, _LANE)

    prep = {
        "w1": jnp.pad(w1, ((0, 0), (0, hp - hidden))).astype(weights_dtype),
        "b1": jnp.pad(b1, ((0, 0), (0, hp - hidden))).astype(jnp.float32),
        "w2": jnp.pad(w2, ((0, hp - hidden), (0, hp - hidden))).astype(weights_dtype),
        "b2": jnp.pad(b2, ((0, 0), (0, hp - hidden))).astype(jnp.float32),
        "w3": jnp.pad(w3, ((0, hp - hidden), (0, op - out_size))).astype(weights_dtype),
        "b3": jnp.pad(b3, ((0, 0), (0, op - out_size))).astype(jnp.float32),
    }
    return prep


@functools.partial(jax.jit, static_argnames=("out_size", "block_batch"))
def qnetwork_forward(x, prepared, *, out_size, block_batch=1024):
    """x: [B, input_size] f32.  prepared: output of prepare_qnetwork_params.
    out_size: true (unpadded) number of actions."""
    w1p, b1p = prepared["w1"], prepared["b1"]
    w2p, b2p = prepared["w2"], prepared["b2"]
    w3p, b3p = prepared["w3"], prepared["b3"]

    batch, in_size = x.shape
    hp = w1p.shape[1]
    op = w3p.shape[1]

    # ---- batch tiling: clamp the tile to the batch so small/typical batches
    # run as a single grid step (one contiguous x DMA, no per-step overhead).
    tb = min(block_batch, _round_up(batch, _SUBLANE))
    tb = _round_up(tb, _SUBLANE)
    bp = _round_up(batch, tb)
    xp = jnp.pad(x, ((0, bp - batch), (0, 0)))
    grid = (bp // tb,)

    kernel = _make_qnet_kernel(vpu_fc1=(in_size <= 4))

    wbytes = (w1p.size + w2p.size + w3p.size) * w1p.dtype.itemsize
    bbytes = (b1p.size + b2p.size + b3p.size) * 4
    flops = 2 * bp * (in_size * hp + hp * hp + hp * op)
    bytes_accessed = bp * in_size * 4 + bp * op * 4 + wbytes + bbytes

    const = lambda i: (0, 0)  # weights/biases resident across the batch grid

    out_padded = pl.pallas_call(
        kernel,
        out_shape=jax.ShapeDtypeStruct((bp, op), jnp.float32),
        grid=grid,
        in_specs=[
            pl.BlockSpec((tb, in_size), lambda i: (i, 0)),   # x tile
            pl.BlockSpec((in_size, hp), const),              # w1
            pl.BlockSpec((1, hp), const),                    # b1
            pl.BlockSpec((hp, hp), const),                   # w2
            pl.BlockSpec((1, hp), const),                    # b2
            pl.BlockSpec((hp, op), const),                   # w3
            pl.BlockSpec((1, op), const),                    # b3
        ],
        out_specs=pl.BlockSpec((tb, op), lambda i: (i, 0)),
        compiler_params=pltpu.CompilerParams(
            dimension_semantics=("parallel",),
        ),
        cost_estimate=pl.CostEstimate(
            flops=flops, transcendentals=0, bytes_accessed=bytes_accessed),
    )(xp, w1p, b1p, w2p, b2p, w3p, b3p)

    return out_padded[:batch, :out_size]


def init_qnetwork_params(key, input_size, hidden_size, output_size):
    """PyTorch nn.Linear default init: U(-1/sqrt(fan_in), 1/sqrt(fan_in))."""
    keys = jax.random.split(key, 6)

    def linear(kw, kb, fan_in, fan_out):
        bound = 1.0 / math.sqrt(fan_in)
        w = jax.random.uniform(kw, (fan_in, fan_out), jnp.float32, -bound, bound)
        b = jax.random.uniform(kb, (1, fan_out), jnp.float32, -bound, bound)
        return w, b

    w1, b1 = linear(keys[0], keys[1], input_size, hidden_size)
    w2, b2 = linear(keys[2], keys[3], hidden_size, hidden_size)
    w3, b3 = linear(keys[4], keys[5], hidden_size, output_size)
    return {"w1": w1, "b1": b1, "w2": w2, "b2": b2, "w3": w3, "b3": b3}


def qnetwork_ref(x, params):
    h = jnp.maximum(x @ params["w1"] + params["b1"], 0.0)
    h = jnp.maximum(h @ params["w2"] + params["b2"], 0.0)
    return h @ params["w3"] + params["b3"]


if __name__ == "__main__":
    # MountainCar-style shapes: obs dim 2, hidden 32, 3 actions.
    input_size, hidden_size, output_size = 2, 32, 3

    key = jax.random.PRNGKey(0)
    k_params, k_x1, k_x2 = jax.random.split(key, 3)
    params = init_qnetwork_params(k_params, input_size, hidden_size, output_size)

    # One-time param preparation (padding hoisted out of the forward path).
    prep_f32 = prepare_qnetwork_params(params, weights_dtype=jnp.float32)

    # Small batch (single grid step).
    x_small = jax.random.normal(k_x1, (8, input_size), dtype=jnp.float32)
    out_small = jax.block_until_ready(
        qnetwork_forward(x_small, prep_f32, out_size=output_size))
    assert out_small.shape == (8, output_size)
    assert jnp.allclose(out_small, qnetwork_ref(x_small, params), atol=1e-5, rtol=1e-5)

    # Larger, non-multiple batch: still collapses to grid=(1,) with tb=304.
    x_big = jax.random.normal(k_x2, (300, input_size), dtype=jnp.float32)
    out_big = jax.block_until_ready(
        qnetwork_forward(x_big, prep_f32, out_size=output_size))
    assert out_big.shape == (300, output_size)
    assert jnp.allclose(out_big, qnetwork_ref(x_big, params), atol=1e-5, rtol=1e-5)

    # bf16-weight path (v6e/v7x MXU rate; f32 accumulation): looser tolerance.
    prep_bf16 = prepare_qnetwork_params(params, weights_dtype=jnp.bfloat16)
    out_bf16 = jax.block_until_ready(
        qnetwork_forward(x_big, prep_bf16, out_size=output_size))
    assert out_bf16.shape == (300, output_size)
    assert jnp.allclose(out_bf16, qnetwork_ref(x_big, params), atol=5e-2, rtol=5e-2)

    print("KERNEL_OK")
</pallas_src>

<mosaic_0001>
module attributes {stable_mosaic.version = 11 : i64} {
  func.func @qnet_kernel(%arg0: i32, %arg1: memref<8x2xf32, #tpu.memory_space<vmem>>, %arg2: memref<2x128xf32, #tpu.memory_space<vmem>>, %arg3: memref<1x128xf32, #tpu.memory_space<vmem>>, %arg4: memref<128x128xf32, #tpu.memory_space<vmem>>, %arg5: memref<1x128xf32, #tpu.memory_space<vmem>>, %arg6: memref<128x128xf32, #tpu.memory_space<vmem>>, %arg7: memref<1x128xf32, #tpu.memory_space<vmem>>, %arg8: memref<8x128xf32, #tpu.memory_space<vmem>>) attributes {dimension_semantics = [#tpu.dimension_semantics<parallel>], iteration_bounds = array<i64: 1>, scalar_prefetch = 0 : i64, scratch_operands = 0 : i64, tpu.core_type = #tpu.core_type<tc>, window_params = [{transform_indices = @transform_0, window_bounds = array<i64: 8, 2>}, {pipeline_mode = #tpu.pipeline_mode<synchronous>, transform_indices = @transform_1, window_bounds = array<i64: 2, 128>}, {pipeline_mode = #tpu.pipeline_mode<synchronous>, transform_indices = @transform_2, window_bounds = array<i64: 1, 128>}, {pipeline_mode = #tpu.pipeline_mode<synchronous>, transform_indices = @transform_3, window_bounds = array<i64: 128, 128>}, {pipeline_mode = #tpu.pipeline_mode<synchronous>, transform_indices = @transform_4, window_bounds = array<i64: 1, 128>}, {pipeline_mode = #tpu.pipeline_mode<synchronous>, transform_indices = @transform_5, window_bounds = array<i64: 128, 128>}, {pipeline_mode = #tpu.pipeline_mode<synchronous>, transform_indices = @transform_6, window_bounds = array<i64: 1, 128>}, {transform_indices = @transform_7, window_bounds = array<i64: 8, 128>}]} {
    %c0 = arith.constant 0 : index
    %c0_0 = arith.constant 0 : index
    %0 = vector.load %arg1[%c0, %c0_0] : memref<8x2xf32, #tpu.memory_space<vmem>>, vector<8x2xf32>
    %c0_1 = arith.constant 0 : index
    %c0_2 = arith.constant 0 : index
    %1 = vector.load %arg2[%c0_1, %c0_2] : memref<2x128xf32, #tpu.memory_space<vmem>>, vector<2x128xf32>
    %c0_3 = arith.constant 0 : index
    %c0_4 = arith.constant 0 : index
    %2 = vector.load %arg3[%c0_3, %c0_4] : memref<1x128xf32, #tpu.memory_space<vmem>>, vector<1x128xf32>
    %3 = vector.shape_cast %2 : vector<1x128xf32> to vector<1x128xf32>
    %4 = vector.broadcast %3 : vector<1x128xf32> to vector<8x128xf32>
    %5 = vector.extract_strided_slice %0 {offsets = [0, 0], sizes = [8, 1], strides = [1, 1]} : vector<8x2xf32> to vector<8x1xf32>
    %6 = vector.extract_strided_slice %1 {offsets = [0, 0], sizes = [1, 128], strides = [1, 1]} : vector<2x128xf32> to vector<1x128xf32>
    %7 = vector.broadcast %5 : vector<8x1xf32> to vector<8x128xf32>
    %8 = vector.broadcast %6 : vector<1x128xf32> to vector<8x128xf32>
    %9 = arith.mulf %7, %8 : vector<8x128xf32>
    %10 = arith.addf %4, %9 : vector<8x128xf32>
    %11 = vector.extract_strided_slice %0 {offsets = [0, 1], sizes = [8, 1], strides = [1, 1]} : vector<8x2xf32> to vector<8x1xf32>
    %12 = vector.extract_strided_slice %1 {offsets = [1, 0], sizes = [1, 128], strides = [1, 1]} : vector<2x128xf32> to vector<1x128xf32>
    %13 = vector.broadcast %11 : vector<8x1xf32> to vector<8x128xf32>
    %14 = vector.broadcast %12 : vector<1x128xf32> to vector<8x128xf32>
    %15 = arith.mulf %13, %14 : vector<8x128xf32>
    %16 = arith.addf %10, %15 : vector<8x128xf32>
    %cst = arith.constant 0.000000e+00 : f32
    %17 = vector.broadcast %cst : f32 to vector<8x128xf32>
    %18 = arith.maximumf %16, %17 : vector<8x128xf32>
    %c0_5 = arith.constant 0 : index
    %c0_6 = arith.constant 0 : index
    %19 = vector.load %arg4[%c0_5, %c0_6] : memref<128x128xf32, #tpu.memory_space<vmem>>, vector<128x128xf32>
    %cst_7 = arith.constant dense<0.000000e+00> : vector<8x128xf32>
    %20 = tpu.matmul %18, %19, %cst_7 {dimension_numbers = #tpu.dot_dimension_numbers<[1], [0], [0], [1], [0, 0, 1, 1], [], []>} : vector<8x128xf32>, vector<128x128xf32>, vector<8x128xf32> -> vector<8x128xf32>
    %c0_8 = arith.constant 0 : index
    %c0_9 = arith.constant 0 : index
    %21 = vector.load %arg5[%c0_8, %c0_9] : memref<1x128xf32, #tpu.memory_space<vmem>>, vector<1x128xf32>
    %22 = vector.broadcast %21 : vector<1x128xf32> to vector<8x128xf32>
    %23 = arith.addf %20, %22 : vector<8x128xf32>
    %cst_10 = arith.constant 0.000000e+00 : f32
    %24 = vector.broadcast %cst_10 : f32 to vector<8x128xf32>
    %25 = arith.maximumf %23, %24 : vector<8x128xf32>
    %c0_11 = arith.constant 0 : index
    %c0_12 = arith.constant 0 : index
    %26 = vector.load %arg6[%c0_11, %c0_12] : memref<128x128xf32, #tpu.memory_space<vmem>>, vector<128x128xf32>
    %cst_13 = arith.constant dense<0.000000e+00> : vector<8x128xf32>
    %27 = tpu.matmul %25, %26, %cst_13 {dimension_numbers = #tpu.dot_dimension_numbers<[1], [0], [0], [1], [0, 0, 1, 1], [], []>} : vector<8x128xf32>, vector<128x128xf32>, vector<8x128xf32> -> vector<8x128xf32>
    %c0_14 = arith.constant 0 : index
    %c0_15 = arith.constant 0 : index
    %28 = vector.load %arg7[%c0_14, %c0_15] : memref<1x128xf32, #tpu.memory_space<vmem>>, vector<1x128xf32>
    %29 = vector.broadcast %28 : vector<1x128xf32> to vector<8x128xf32>
    %30 = arith.addf %27, %29 : vector<8x128xf32>
    %c0_16 = arith.constant 0 : index
    %c0_17 = arith.constant 0 : index
    %31 = vector.load %arg8[%c0_16, %c0_17] : memref<8x128xf32, #tpu.memory_space<vmem>>, vector<8x128xf32>
    tpu.vector_store %arg8[%c0_16, %c0_17], %30 {strides = array<i32>} : memref<8x128xf32, #tpu.memory_space<vmem>>, vector<8x128xf32>,
    return
  }
  func.func @transform_0(%arg0: i32) -> (i32, i32) {
    %c0_i32 = arith.constant 0 : i32
    %c0_i32_0 = arith.constant 0 : i32
    return %arg0, %c0_i32 : i32, i32
  }
  func.func @transform_1(%arg0: i32) -> (i32, i32) {
    %c0_i32 = arith.constant 0 : i32
    %c0_i32_0 = arith.constant 0 : i32
    %c0_i32_1 = arith.constant 0 : i32
    return %c0_i32, %c0_i32_0 : i32, i32
  }
  func.func @transform_2(%arg0: i32) -> (i32, i32) {
    %c0_i32 = arith.constant 0 : i32
    %c0_i32_0 = arith.constant 0 : i32
    %c0_i32_1 = arith.constant 0 : i32
    return %c0_i32, %c0_i32_0 : i32, i32
  }
  func.func @transform_3(%arg0: i32) -> (i32, i32) {
    %c0_i32 = arith.constant 0 : i32
    %c0_i32_0 = arith.constant 0 : i32
    %c0_i32_1 = arith.constant 0 : i32
    return %c0_i32, %c0_i32_0 : i32, i32
  }
  func.func @transform_4(%arg0: i32) -> (i32, i32) {
    %c0_i32 = arith.constant 0 : i32
    %c0_i32_0 = arith.constant 0 : i32
    %c0_i32_1 = arith.constant 0 : i32
    return %c0_i32, %c0_i32_0 : i32, i32
  }
  func.func @transform_5(%arg0: i32) -> (i32, i32) {
    %c0_i32 = arith.constant 0 : i32
    %c0_i32_0 = arith.constant 0 : i32
    %c0_i32_1 = arith.constant 0 : i32
    return %c0_i32, %c0_i32_0 : i32, i32
  }
  func.func @transform_6(%arg0: i32) -> (i32, i32) {
    %c0_i32 = arith.constant 0 : i32
    %c0_i32_0 = arith.constant 0 : i32
    %c0_i32_1 = arith.constant 0 : i32
    return %c0_i32, %c0_i32_0 : i32, i32
  }
  func.func @transform_7(%arg0: i32) -> (i32, i32) {
    %c0_i32 = arith.constant 0 : i32
    %c0_i32_0 = arith.constant 0 : i32
    return %arg0, %c0_i32 : i32, i32
  }
}

</mosaic_0001>

<llo_original>
// kernel: qnetwork_forward.1
$region0: #{qnetwork_forward.1}
  #allocation0 [shape = 'u32[]', space=smem, size = 0x4, offset = 0x4, fixed_abs, tag = 'smem constant byte address 0x4 - core index']
  #allocation1 [shape = 'u32[144,128]{1,0:T(1,128)}', space=vmem, size = 0x12000, scoped, tag = 'internal scratch']
  %s0 = inlined_call_operand.vmem [shape: f32[8,2], index: 0, kind: input, shape index: {}]
  %s1 = inlined_call_operand.vmem [shape: f32[2,128], index: 1, kind: input, shape index: {}]
  %s2 = inlined_call_operand.vmem [shape: f32[1,128], index: 2, kind: input, shape index: {}]
  %s3 = inlined_call_operand.hbm [shape: f32[128,128], index: 3, kind: input, shape index: {}]
  %s4 = inlined_call_operand.vmem [shape: f32[1,128], index: 4, kind: input, shape index: {}]
  %s5 = inlined_call_operand.hbm [shape: f32[128,128], index: 5, kind: input, shape index: {}]
  %s6 = inlined_call_operand.vmem [shape: f32[1,128], index: 6, kind: input, shape index: {}]
  %s7 = inlined_call_operand.vmem [shape: f32[8,128], index: 7, kind: output, shape index: {}]
  %s8 = sld [smem:[#allocation0]]
  $region46: #{qnetwork_forward.1} parent=0
    _
  %s10 = ssub.s32 1, %s8
  %s11 = scalar_select 0, %s10, %s8
  $region1: #{qnetwork_forward.1} parent=0
    #allocation2 [shape = 'u8[65536]{0}', space=vmem, size = 0x10000, scoped, tag = 'input window, operand 3, single buffered']
    #allocation3 [shape = 's32[1]{0}', space=sflag, size = 0x4, scoped, tag = 'scoped memory for qnetwork_forward.1']
    #allocation4 [shape = 'u8[65536]{0}', space=vmem, size = 0x10000, scoped, tag = 'input window, operand 5, single buffered']
    #allocation5 [shape = 's32[1]{0}', space=sflag, size = 0x4, scoped, tag = 'scoped memory for qnetwork_forward.1']
    %12 = vsyncpa [#allocation3], 0
    %13 = vsyncpa [#allocation5], 0
    // Predicated region
    $region2: #{qnetwork_forward.1} parent=1 // pred_check
      _
    $region3: #{qnetwork_forward.1} parent=1 // pred_check_branch
      %15 = sbr.rel (0) target = $region5
    $region4: #{qnetwork_forward.1} parent=1 // pred_region
      _
    $region5: #{qnetwork_forward.1} parent=1 // pred_fallthru
      _
    // Predicated region
    $region6: #{qnetwork_forward.1} parent=1 // pred_check
      _
    $region7: #{qnetwork_forward.1} parent=1 // pred_check_branch
      %17 = sbr.rel (0) target = $region9
    $region8: #{qnetwork_forward.1} parent=1 // pred_region
      _
    $region9: #{qnetwork_forward.1} parent=1 // pred_fallthru
      _
    // Predicated region
    $region10: #{qnetwork_forward.1} parent=1 // pred_check
      _
    $region11: #{qnetwork_forward.1} parent=1 // pred_check_branch
      %19 = sbr.rel (0) target = $region13
    $region12: #{qnetwork_forward.1} parent=1 // pred_region
      _
    $region13: #{qnetwork_forward.1} parent=1 // pred_fallthru
      _
    // Predicated region
    $region14: #{qnetwork_forward.1} parent=1 // pred_check
      _
    $region15: #{qnetwork_forward.1} parent=1 // pred_check_branch
      %21 = sbr.rel (0) target = $region17
    $region16: #{qnetwork_forward.1} parent=1 // pred_region
      %s23 = ssub.s32 2048, 2048
      %24 = vsyncadd [#allocation3], %s23
      %s25 = sshll.u32 [#allocation2], 4
      %s26 = int_to_ptr.vmem [resolvable:$true] %s25
      %31 = dma.hbm_to_vmem [thread:$0]  %s3, 2048, %s26, [#allocation3], 128, 128, 8
    $region17: #{qnetwork_forward.1} parent=1 // pred_fallthru
      _
    // Predicated region
    $region18: #{qnetwork_forward.1} parent=1 // pred_check
      _
    $region19: #{qnetwork_forward.1} parent=1 // pred_check_branch
      %33 = sbr.rel (0) target = $region21
    $region20: #{qnetwork_forward.1} parent=1 // pred_region
      _
    $region21: #{qnetwork_forward.1} parent=1 // pred_fallthru
      _
    // Predicated region
    $region22: #{qnetwork_forward.1} parent=1 // pred_check
      _
    $region23: #{qnetwork_forward.1} parent=1 // pred_check_branch
      %35 = sbr.rel (0) target = $region25
    $region24: #{qnetwork_forward.1} parent=1 // pred_region
      %s37 = ssub.s32 2048, 2048
      %38 = vsyncadd [#allocation5], %s37
      %s39 = sshll.u32 [#allocation4], 4
      %s40 = int_to_ptr.vmem [resolvable:$true] %s39
      %45 = dma.hbm_to_vmem [thread:$0]  %s5, 2048, %s40, [#allocation5], 128, 128, 8
    $region25: #{qnetwork_forward.1} parent=1 // pred_fallthru
      _
    // Predicated region
    $region26: #{qnetwork_forward.1} parent=1 // pred_check
      _
    $region27: #{qnetwork_forward.1} parent=1 // pred_check_branch
      %47 = sbr.rel (0) target = $region29
    $region28: #{qnetwork_forward.1} parent=1 // pred_region
      _
    $region29: #{qnetwork_forward.1} parent=1 // pred_fallthru
      _
    // Predicated region
    $region30: #{qnetwork_forward.1} parent=1 // pred_check
      _
    $region31: #{qnetwork_forward.1} parent=1 // pred_check_branch
      %49 = sbr.rel (0) target = $region33
    $region32: #{qnetwork_forward.1} parent=1 // pred_region
      %50 = dma.done [#allocation3], 2048
    $region33: #{qnetwork_forward.1} parent=1 // pred_fallthru
      _
    // Predicated region
    $region34: #{qnetwork_forward.1} parent=1 // pred_check
      _
    $region35: #{qnetwork_forward.1} parent=1 // pred_check_branch
      %52 = sbr.rel (0) target = $region37
    $region36: #{qnetwork_forward.1} parent=1 // pred_region
      %53 = dma.done [#allocation5], 2048
    $region37: #{qnetwork_forward.1} parent=1 // pred_fallthru
      _
    %v54 = vld [vmem:[%s0] sm:$0xff]
    %v55 = vld [vmem:[%s1] sm:$0x3]
    %v56 = vld [vmem:[%s2] sm:$0x1]
    %v58 = vlaneseq
    %v59 = vshrl.u32 %v58, 7
    %v60 = vsub.s32 0, %v59
    %v61 = vrot.slane %v56, %v60
    %64 = vset.pattern.permute.xlu0 0
    %65 = vperm.xlu0 %64, %v54
    %v66 = vpop.permute.xlu0 %65
    %v68 = vlaneseq
    %v69 = vshrl.u32 %v68, 7
    %v70 = vsub.s32 0, %v69
    %v71 = vrot.slane %v55, %v70
    %v72 = vmul.f32 %v66, %v71
    %v73 = vadd.f32 %v61, %v72
    %74 = vset.pattern.permute.xlu0 1
    %75 = vperm.xlu0 %74, %v54
    %v76 = vpop.permute.xlu0 %75
    %v78 = vlaneseq
    %v79 = vshrl.u32 %v78, 7
    %v80 = vsub.s32 1, %v79
    %v81 = vrot.slane %v55, %v80
    %v82 = vmul.f32 %v76, %v81
    %v83 = vadd.f32 %v73, %v82
    %v84 = vmax.f32 %v83, 0.0
    %v85 = vld [vmem:[#allocation2] sm:$0xff]
    %v86 = vld [vmem:[#allocation2 + $0x8] sm:$0xff]
    %v87 = vld [vmem:[#allocation2 + $0x10] sm:$0xff]
    %v88 = vld [vmem:[#allocation2 + $0x18] sm:$0xff]
    %v89 = vld [vmem:[#allocation2 + $0x20] sm:$0xff]
    %v90 = vld [vmem:[#allocation2 + $0x28] sm:$0xff]
    %v91 = vld [vmem:[#allocation2 + $0x30] sm:$0xff]
    %v92 = vld [vmem:[#allocation2 + $0x38] sm:$0xff]
    %v93 = vld [vmem:[#allocation2 + $0x40] sm:$0xff]
    %v94 = vld [vmem:[#allocation2 + $0x48] sm:$0xff]
    %v95 = vld [vmem:[#allocation2 + $0x50] sm:$0xff]
    %v96 = vld [vmem:[#allocation2 + $0x58] sm:$0xff]
    %v97 = vld [vmem:[#allocation2 + $0x60] sm:$0xff]
    %v98 = vld [vmem:[#allocation2 + $0x68] sm:$0xff]
    %v99 = vld [vmem:[#allocation2 + $0x70] sm:$0xff]
    %v100 = vld [vmem:[#allocation2 + $0x78] sm:$0xff]
    %v101 = vld [vmem:[%s4] sm:$0x1]
    %v103 = vlaneseq
    %v104 = vshrl.u32 %v103, 7
    %v105 = vsub.s32 0, %v104
    %v106 = vrot.slane %v101, %v105
    %108 = vmatprep.subr.mxu0 0.0
    %109 = vmatpush1.msra.mxu0 %v85
    %110 = vmatprep.subr.mxu0 0.0
    %111 = vmatpush1.msra.mxu0 %v86
    %112 = vmatprep.subr.mxu0 0.0
    %113 = vmatpush1.msra.mxu0 %v87
    %114 = vmatprep.subr.mxu0 0.0
    %115 = vmatpush1.msra.mxu0 %v88
    %116 = vmatprep.subr.mxu0 0.0
    %117 = vmatpush1.msra.mxu0 %v89
    %118 = vmatprep.subr.mxu0 0.0
    %119 = vmatpush1.msra.mxu0 %v90
    %120 = vmatprep.subr.mxu0 0.0
    %121 = vmatpush1.msra.mxu0 %v91
    %122 = vmatprep.subr.mxu0 0.0
    %123 = vmatpush1.msra.mxu0 %v92
    %124 = vmatprep.subr.mxu0 0.0
    %125 = vmatpush1.msra.mxu0 %v93
    %126 = vmatprep.subr.mxu0 0.0
    %127 = vmatpush1.msra.mxu0 %v94
    %128 = vmatprep.subr.mxu0 0.0
    %129 = vmatpush1.msra.mxu0 %v95
    %130 = vmatprep.subr.mxu0 0.0
    %131 = vmatpush1.msra.mxu0 %v96
    %132 = vmatprep.subr.mxu0 0.0
    %133 = vmatpush1.msra.mxu0 %v97
    %134 = vmatprep.subr.mxu0 0.0
    %135 = vmatpush1.msra.mxu0 %v98
    %136 = vmatprep.subr.mxu0 0.0
    %137 = vmatpush1.msra.mxu0 %v99
    %138 = vmatprep.subr.mxu0 0.0
    %139 = vmatpush1.msra.mxu0 %v100
    %140 = vmatprep.subr.mxu0 0.0
    %141 = vmatpush1.msra.mxu0 0.0
    %142 = vmatprep.subr.mxu0 0.0
    %143 = vmatpush1.msra.mxu0 0.0
    %144 = vmatprep.subr.mxu0 0.0
    %145 = vmatpush1.msra.mxu0 0.0
    %146 = vmatprep.subr.mxu0 0.0
    %147 = vmatpush1.msra.mxu0 0.0
    %148 = vmatprep.subr.mxu0 0.0
    %149 = vmatpush1.msra.mxu0 0.0
    %150 = vmatprep.subr.mxu0 0.0
    %151 = vmatpush1.msra.mxu0 0.0
    %152 = vmatprep.subr.mxu0 0.0
    %153 = vmatpush1.msra.mxu0 0.0
    %154 = vmatprep.subr.mxu0 0.0
    %155 = vmatpush1.msra.mxu0 0.0
    %156 = vmatprep.subr.mxu0 0.0
    %157 = vmatpush1.msra.mxu0 0.0
    %158 = vmatprep.subr.mxu0 0.0
    %159 = vmatpush1.msra.mxu0 0.0
    %160 = vmatprep.subr.mxu0 0.0
    %161 = vmatpush1.msra.mxu0 0.0
    %162 = vmatprep.subr.mxu0 0.0
    %163 = vmatpush1.msra.mxu0 0.0
    %164 = vmatprep.subr.mxu0 0.0
    %165 = vmatpush1.msra.mxu0 0.0
    %166 = vmatprep.subr.mxu0 0.0
    %167 = vmatpush1.msra.mxu0 0.0
    %168 = vmatprep.subr.mxu0 0.0
    %169 = vmatpush1.msra.mxu0 0.0
    %170 = vmatprep.subr.mxu0 0.0
    %171 = vmatpush1.msra.mxu0 0.0
    %172 = vmatprep.mubr.f32.mxu0 0.0
    %173 = vmatmul.mubr.f32.gmra.mrb[0].mxu0 %v84
    %v174 = vpop.f32.mrb[0].mxu0
    %v175 = vadd.f32 %v106, %v174
    %v176 = vpop.f32.mrb[0].mxu0
    %177 = vdwg.mxu0
    %v178 = vmax.f32 %v175, 0.0
    %v179 = vld [vmem:[#allocation4] sm:$0xff]
    %v180 = vld [vmem:[#allocation4 + $0x8] sm:$0xff]
    %v181 = vld [vmem:[#allocation4 + $0x10] sm:$0xff]
    %v182 = vld [vmem:[#allocation4 + $0x18] sm:$0xff]
    %v183 = vld [vmem:[#allocation4 + $0x20] sm:$0xff]
    %v184 = vld [vmem:[#allocation4 + $0x28] sm:$0xff]
    %v185 = vld [vmem:[#allocation4 + $0x30] sm:$0xff]
    %v186 = vld [vmem:[#allocation4 + $0x38] sm:$0xff]
    %v187 = vld [vmem:[#allocation4 + $0x40] sm:$0xff]
    %v188 = vld [vmem:[#allocation4 + $0x48] sm:$0xff]
    %v189 = vld [vmem:[#allocation4 + $0x50] sm:$0xff]
    %v190 = vld [vmem:[#allocation4 + $0x58] sm:$0xff]
    %v191 = vld [vmem:[#allocation4 + $0x60] sm:$0xff]
    %v192 = vld [vmem:[#allocation4 + $0x68] sm:$0xff]
    %v193 = vld [vmem:[#allocation4 + $0x70] sm:$0xff]
    %v194 = vld [vmem:[#allocation4 + $0x78] sm:$0xff]
    %v195 = vld [vmem:[%s6] sm:$0x1]
    %v197 = vlaneseq
    %v198 = vshrl.u32 %v197, 7
    %v199 = vsub.s32 0, %v198
    %v200 = vrot.slane %v195, %v199
    %202 = vmatprep.subr.mxu0 0.0
    %203 = vmatpush1.msra.mxu0 %v179
    %204 = vmatprep.subr.mxu0 0.0
    %205 = vmatpush1.msra.mxu0 %v180
    %206 = vmatprep.subr.mxu0 0.0
    %207 = vmatpush1.msra.mxu0 %v181
    %208 = vmatprep.subr.mxu0 0.0
    %209 = vmatpush1.msra.mxu0 %v182
    %210 = vmatprep.subr.mxu0 0.0
    %211 = vmatpush1.msra.mxu0 %v183
    %212 = vmatprep.subr.mxu0 0.0
    %213 = vmatpush1.msra.mxu0 %v184
    %214 = vmatprep.subr.mxu0 0.0
    %215 = vmatpush1.msra.mxu0 %v185
    %216 = vmatprep.subr.mxu0 0.0
    %217 = vmatpush1.msra.mxu0 %v186
    %218 = vmatprep.subr.mxu0 0.0
    %219 = vmatpush1.msra.mxu0 %v187
    %220 = vmatprep.subr.mxu0 0.0
    %221 = vmatpush1.msra.mxu0 %v188
    %222 = vmatprep.subr.mxu0 0.0
    %223 = vmatpush1.msra.mxu0 %v189
    %224 = vmatprep.subr.mxu0 0.0
    %225 = vmatpush1.msra.mxu0 %v190
    %226 = vmatprep.subr.mxu0 0.0
    %227 = vmatpush1.msra.mxu0 %v191
    %228 = vmatprep.subr.mxu0 0.0
    %229 = vmatpush1.msra.mxu0 %v192
    %230 = vmatprep.subr.mxu0 0.0
    %231 = vmatpush1.msra.mxu0 %v193
    %232 = vmatprep.subr.mxu0 0.0
    %233 = vmatpush1.msra.mxu0 %v194
    %234 = vmatprep.subr.mxu0 0.0
    %235 = vmatpush1.msra.mxu0 0.0
    %236 = vmatprep.subr.mxu0 0.0
    %237 = vmatpush1.msra.mxu0 0.0
    %238 = vmatprep.subr.mxu0 0.0
    %239 = vmatpush1.msra.mxu0 0.0
    %240 = vmatprep.subr.mxu0 0.0
    %241 = vmatpush1.msra.mxu0 0.0
    %242 = vmatprep.subr.mxu0 0.0
    %243 = vmatpush1.msra.mxu0 0.0
    %244 = vmatprep.subr.mxu0 0.0
    %245 = vmatpush1.msra.mxu0 0.0
    %246 = vmatprep.subr.mxu0 0.0
    %247 = vmatpush1.msra.mxu0 0.0
    %248 = vmatprep.subr.mxu0 0.0
    %249 = vmatpush1.msra.mxu0 0.0
    %250 = vmatprep.subr.mxu0 0.0
    %251 = vmatpush1.msra.mxu0 0.0
    %252 = vmatprep.subr.mxu0 0.0
    %253 = vmatpush1.msra.mxu0 0.0
    %254 = vmatprep.subr.mxu0 0.0
    %255 = vmatpush1.msra.mxu0 0.0
    %256 = vmatprep.subr.mxu0 0.0
    %257 = vmatpush1.msra.mxu0 0.0
    %258 = vmatprep.subr.mxu0 0.0
    %259 = vmatpush1.msra.mxu0 0.0
    %260 = vmatprep.subr.mxu0 0.0
    %261 = vmatpush1.msra.mxu0 0.0
    %262 = vmatprep.subr.mxu0 0.0
    %263 = vmatpush1.msra.mxu0 0.0
    %264 = vmatprep.subr.mxu0 0.0
    %265 = vmatpush1.msra.mxu0 0.0
    %266 = vmatprep.mubr.f32.mxu0 0.0
    %267 = vmatmul.mubr.f32.gmra.mrb[0].mxu0 %v178
    %v268 = vpop.f32.mrb[0].mxu0
    %v269 = vadd.f32 %v200, %v268
    %v270 = vpop.f32.mrb[0].mxu0
    %271 = vdwg.mxu0
    %272 = vst [vmem:[%s7] sm:$0xff] %v269
    // Predicated region
    $region38: #{qnetwork_forward.1} parent=1 // pred_check
      _
    $region39: #{qnetwork_forward.1} parent=1 // pred_check_branch
      %274 = sbr.rel (0) target = $region41
    $region40: #{qnetwork_forward.1} parent=1 // pred_region
      _
    $region41: #{qnetwork_forward.1} parent=1 // pred_fallthru
      _
    // Predicated region
    $region42: #{qnetwork_forward.1} parent=1 // pred_check
      _
    $region43: #{qnetwork_forward.1} parent=1 // pred_check_branch
      %276 = sbr.rel (0) target = $region45
    $region44: #{qnetwork_forward.1} parent=1 // pred_region
      _
    $region45: #{qnetwork_forward.1} parent=1 // pred_fallthru
      _
    %277 = vsyncpa [#allocation3], 1
    %278 = vsyncpa [#allocation5], 1

</llo_original>
